<compile_context>
chip_gen: v5e
topology: v5e:2x2
jax: 0.10.0
libtpu: 0.0.40
codegen_flags: <defaults>
</compile_context>

<pallas_src>
import functools

import jax
import jax.numpy as jnp
from jax.experimental import pallas as pl
from jax.experimental.pallas import tpu as pltpu


def conv1d_kernel(w_ref, b_ref, x_ref, o_ref, *, K, Lo):
    # w_ref: SMEM (K,) f32 taps, b_ref: SMEM (1,) f32 bias
    # x_ref: VMEM (TN, L) f32 input block, o_ref: VMEM (TN, Lo) f32 output block
    x = x_ref[...]                              # (TN, L)

    # Tap 0 with the bias folded in (no separate full-block broadcast init).
    acc = w_ref[0] * x[:, 0:Lo] + b_ref[0]

    # Remaining taps: static sliding-window slices of the in-VMEM block.
    for k in range(1, K):
        acc = acc + w_ref[k] * x[:, k:k + Lo]

    o_ref[...] = acc.astype(o_ref.dtype)


def _pick_batch_tile(N, L, Lo, K, budget_bytes=4 << 20):
    """Rows per grid block.

    Constraints:
      * TN is a multiple of 8 (sublane-dense) OR equals N (full-dim block).
      * TN divides N exactly (no wrapper-side batch padding -> no extra HBM pass).
      * Double-buffered in+out blocks plus the K-1 tap temporaries stay within
        the (conservative, v7x-safe) VMEM budget.
      * Prefer >= 2 grid steps so the "parallel" axis feeds both v7x TensorCores.
    """
    # f32 bytes per row: in+out double-buffered, plus K-1 block-sized tap temps.
    bytes_per_row = 4 * (L + Lo) * 2 + 4 * L * (K - 1)
    cap = max(8, budget_bytes // bytes_per_row)
    cap = min(cap, 512)
    if N % 8 != 0 or N <= 8:
        return N                                # single full-dim block (toy shapes)
    best = 8
    t = 16
    while t <= min(N // 2, cap):                # keep >= 2 grid steps
        if N % t == 0:
            best = t
        t += 8
    return best


@jax.jit
def conv1d_pallas(x, weight, bias):
    """x: (N, 1, L), weight: (1, 1, K), bias: (1,) -> (N, 1, L - K + 1)."""
    N, Cin, L = x.shape
    Cout, Cin2, K = weight.shape
    assert Cin == 1 and Cout == 1 and Cin2 == 1, "kernel specialised to 1->1 channels"
    Lo = L - K + 1
    assert Lo >= 1

    # Free reshapes only -- no padded-slab construction, no extra HBM passes.
    x2 = x.reshape(N, L).astype(jnp.float32)
    w1 = weight.reshape(K).astype(jnp.float32)
    b1 = bias.reshape(1).astype(jnp.float32)

    TN = _pick_batch_tile(N, L, Lo, K)

    out = pl.pallas_call(
        functools.partial(conv1d_kernel, K=K, Lo=Lo),
        out_shape=jax.ShapeDtypeStruct((N, Lo), jnp.float32),
        grid=(N // TN,),
        in_specs=[
            pl.BlockSpec(memory_space=pltpu.SMEM),       # weight taps (scalars)
            pl.BlockSpec(memory_space=pltpu.SMEM),       # bias (scalar)
            pl.BlockSpec((TN, L), lambda i: (i, 0)),     # input rows, full-L block
        ],
        out_specs=pl.BlockSpec((TN, Lo), lambda i: (i, 0)),  # output rows, full-Lo block
        compiler_params=pltpu.CompilerParams(
            dimension_semantics=("parallel",),           # megacore / v7x TC split
            vmem_limit_bytes=32 * 1024 * 1024,           # raise v5e's 16 MiB default
        ),
    )(w1, b1, x2)

    return out.reshape(N, 1, Lo)


def conv1d_ref(x, weight, bias):
    """Plain-JAX reference (valid cross-correlation, 1->1 channels)."""
    N, _, L = x.shape
    K = weight.shape[-1]
    Lo = L - K + 1
    acc = jnp.zeros((N, 1, Lo), jnp.float32) + bias[0]
    for k in range(K):
        acc = acc + weight[0, 0, k] * x[:, :, k:k + Lo].astype(jnp.float32)
    return acc


if __name__ == "__main__":
    key = jax.random.PRNGKey(0)
    kw, kb, kx = jax.random.split(key, 3)

    # Deterministic Conv1d(1, 1, 3) parameters (weight (1,1,3), bias (1,)).
    bound = 1.0 / (1 * 3) ** 0.5                 # PyTorch default init range
    weight = jax.random.uniform(kw, (1, 1, 3), jnp.float32, -bound, bound)
    bias = jax.random.uniform(kb, (1,), jnp.float32, -bound, bound)

    # Case 1: the PyTorch example input [[[1, 2, ..., 10]]] -> shape (1, 1, 10).
    x = jnp.arange(1.0, 11.0, dtype=jnp.float32).reshape(1, 1, 10)
    out = jax.block_until_ready(conv1d_pallas(x, weight, bias))
    ref = conv1d_ref(x, weight, bias)
    assert out.shape == (1, 1, 8), out.shape
    assert jnp.allclose(out, ref, atol=1e-5, rtol=1e-5), (out, ref)

    # Case 2: small gridded shape (TN=8, grid=(2,), non-128-multiple Lo) to
    # exercise the batch-tiled path.
    x_big = jax.random.normal(kx, (16, 1, 256), jnp.float32)
    out_big = jax.block_until_ready(conv1d_pallas(x_big, weight, bias))
    ref_big = conv1d_ref(x_big, weight, bias)
    assert out_big.shape == (16, 1, 254), out_big.shape
    assert jnp.allclose(out_big, ref_big, atol=1e-5, rtol=1e-5)

    print("KERNEL_OK")
</pallas_src>

<mosaic_0001>
module attributes {stable_mosaic.version = 11 : i64} {
  func.func @conv1d_kernel(%arg0: i32, %arg1: memref<3xf32, #tpu.memory_space<smem>>, %arg2: memref<1xf32, #tpu.memory_space<smem>>, %arg3: memref<1x10xf32, #tpu.memory_space<vmem>>, %arg4: memref<1x8xf32, #tpu.memory_space<vmem>>) attributes {dimension_semantics = [#tpu.dimension_semantics<parallel>], iteration_bounds = array<i64: 1>, scalar_prefetch = 0 : i64, scratch_operands = 0 : i64, tpu.core_type = #tpu.core_type<tc>, window_params = [{transform_indices = @transform_0, window_bounds = array<i64: 3>}, {transform_indices = @transform_1, window_bounds = array<i64: 1>}, {transform_indices = @transform_2, window_bounds = array<i64: 1, 10>}, {transform_indices = @transform_3, window_bounds = array<i64: 1, 8>}]} {
    %c0 = arith.constant 0 : index
    %c0_0 = arith.constant 0 : index
    %0 = vector.load %arg3[%c0, %c0_0] : memref<1x10xf32, #tpu.memory_space<vmem>>, vector<1x10xf32>
    %c0_1 = arith.constant 0 : index
    %1 = memref.load %arg1[%c0_1] : memref<3xf32, #tpu.memory_space<smem>>
    %2 = vector.extract_strided_slice %0 {offsets = [0, 0], sizes = [1, 8], strides = [1, 1]} : vector<1x10xf32> to vector<1x8xf32>
    %3 = vector.broadcast %1 : f32 to vector<1x8xf32>
    %4 = arith.mulf %3, %2 : vector<1x8xf32>
    %c0_2 = arith.constant 0 : index
    %5 = memref.load %arg2[%c0_2] : memref<1xf32, #tpu.memory_space<smem>>
    %6 = vector.broadcast %5 : f32 to vector<1x8xf32>
    %7 = arith.addf %4, %6 : vector<1x8xf32>
    %c1 = arith.constant 1 : index
    %8 = memref.load %arg1[%c1] : memref<3xf32, #tpu.memory_space<smem>>
    %9 = vector.extract_strided_slice %0 {offsets = [0, 1], sizes = [1, 8], strides = [1, 1]} : vector<1x10xf32> to vector<1x8xf32>
    %10 = vector.broadcast %8 : f32 to vector<1x8xf32>
    %11 = arith.mulf %10, %9 : vector<1x8xf32>
    %12 = arith.addf %7, %11 : vector<1x8xf32>
    %c2 = arith.constant 2 : index
    %13 = memref.load %arg1[%c2] : memref<3xf32, #tpu.memory_space<smem>>
    %14 = vector.extract_strided_slice %0 {offsets = [0, 2], sizes = [1, 8], strides = [1, 1]} : vector<1x10xf32> to vector<1x8xf32>
    %15 = vector.broadcast %13 : f32 to vector<1x8xf32>
    %16 = arith.mulf %15, %14 : vector<1x8xf32>
    %17 = arith.addf %12, %16 : vector<1x8xf32>
    %c0_3 = arith.constant 0 : index
    %c0_4 = arith.constant 0 : index
    %18 = vector.load %arg4[%c0_3, %c0_4] : memref<1x8xf32, #tpu.memory_space<vmem>>, vector<1x8xf32>
    tpu.vector_store %arg4[%c0_3, %c0_4], %17 {strides = array<i32>} : memref<1x8xf32, #tpu.memory_space<vmem>>, vector<1x8xf32>,
    return
  }
  func.func @transform_0(%arg0: i32) -> i32 {
    %c0_i32 = arith.constant 0 : i32
    %c0_i32_0 = arith.constant 0 : i32
    return %c0_i32 : i32
  }
  func.func @transform_1(%arg0: i32) -> i32 {
    %c0_i32 = arith.constant 0 : i32
    %c0_i32_0 = arith.constant 0 : i32
    return %c0_i32 : i32
  }
  func.func @transform_2(%arg0: i32) -> (i32, i32) {
    %c0_i32 = arith.constant 0 : i32
    %c0_i32_0 = arith.constant 0 : i32
    return %arg0, %c0_i32 : i32, i32
  }
  func.func @transform_3(%arg0: i32) -> (i32, i32) {
    %c0_i32 = arith.constant 0 : i32
    %c0_i32_0 = arith.constant 0 : i32
    return %arg0, %c0_i32 : i32, i32
  }
}

</mosaic_0001>

<llo_original>
// kernel: conv1d_pallas.1
$region0: #{conv1d_pallas.1}
  #allocation0 [shape = 'u32[]', space=smem, size = 0x4, offset = 0x4, fixed_abs, tag = 'smem constant byte address 0x4 - core index']
  #allocation1 [shape = 'u32[72,128]{1,0:T(1,128)}', space=vmem, size = 0x9000, scoped, tag = 'internal scratch']
  #allocation2 [shape = 'f32[1]{0:T(128)S(6)}', space=smem, size = 0x200, scoped, tag = 'scoped memory for conv1d_pallas.1']
  %s0 = inlined_call_operand.vmem [shape: f32[3], index: 0, kind: input, shape index: {}]
  %s1 = inlined_call_operand.<no memory space> [shape: f32[1], index: 1, kind: input, shape index: {}]
  %s2 = inlined_call_operand.vmem [shape: f32[1,10], index: 2, kind: input, shape index: {}]
  %s3 = inlined_call_operand.hbm [shape: f32[1,8], index: 3, kind: output, shape index: {}]
  %s4 = sld [smem:[#allocation0]]
  $region26: #{conv1d_pallas.1} parent=0
    _
  %s6 = ssub.s32 1, %s4
  %s7 = scalar_select 0, %s6, %s4
  %8 = sst [smem:[#allocation2]] %s1
  $region1: #{conv1d_pallas.1} parent=0
    #allocation3 [shape = 'u8[512]{0}', space=smem, size = 0x200, scoped, tag = 'input window, operand 0, single buffered']
    #allocation4 [shape = 's32[1]{0}', space=sflag, size = 0x4, scoped, tag = 'scoped memory for conv1d_pallas.1']
    #allocation5 [shape = 's32[1]{0}', space=sflag, size = 0x4, scoped, tag = 'scoped memory for conv1d_pallas.1']
    #allocation6 [shape = 'u8[512]{0}', space=vmem, size = 0x400, scoped, tag = 'output window, operand 0, single buffered']
    %9 = vsyncpa [#allocation5], 0
    %10 = vsyncpa [#allocation4], 0
    // Predicated region
    $region2: #{conv1d_pallas.1} parent=1 // pred_check
      _
    $region3: #{conv1d_pallas.1} parent=1 // pred_check_branch
      %12 = sbr.rel (0) target = $region5
    $region4: #{conv1d_pallas.1} parent=1 // pred_region
      %14 = vsyncadd [#allocation5], 0
      %s16 = sshll.u32 %s0, 4
      %s17 = int_to_ptr.vmem [resolvable:$true] %s16
      %19 = dma.vmem_to_smem %s17, 16, [#allocation3], [#allocation5]
    $region5: #{conv1d_pallas.1} parent=1 // pred_fallthru
      _
    // Predicated region
    $region6: #{conv1d_pallas.1} parent=1 // pred_check
      _
    $region7: #{conv1d_pallas.1} parent=1 // pred_check_branch
      %21 = sbr.rel (0) target = $region9
    $region8: #{conv1d_pallas.1} parent=1 // pred_region
      _
    $region9: #{conv1d_pallas.1} parent=1 // pred_fallthru
      _
    // Predicated region
    $region10: #{conv1d_pallas.1} parent=1 // pred_check
      _
    $region11: #{conv1d_pallas.1} parent=1 // pred_check_branch
      %23 = sbr.rel (0) target = $region13
    $region12: #{conv1d_pallas.1} parent=1 // pred_region
      _
    $region13: #{conv1d_pallas.1} parent=1 // pred_fallthru
      _
    // Predicated region
    $region14: #{conv1d_pallas.1} parent=1 // pred_check
      _
    $region15: #{conv1d_pallas.1} parent=1 // pred_check_branch
      %25 = sbr.rel (0) target = $region17
    $region16: #{conv1d_pallas.1} parent=1 // pred_region
      %27 = dma.done [#allocation5], 16
    $region17: #{conv1d_pallas.1} parent=1 // pred_fallthru
      _
    %28 = sfence
    %v29 = vld [vmem:[%s2] sm:$0x1]
    %s30 = sld [smem:[#allocation3]]
    %v31 = vstv %s30
    %v32 = vmul.f32 %v31, %v29
    %s33 = sld [smem:[#allocation2]]
    %v34 = vstv %s33
    %v35 = vadd.f32 %v32, %v34
    %s36 = sld [smem:[#allocation3 + $0x1]]
    %v37 = vstv %s36
    %v38 = vmul.f32 %v37, %v29
    %40 = vrot.lane.b32.xlu0 %v38, 127
    %v41 = vpop.permute.xlu0 %40
    %v43 = vadd.f32 %v35, %v41
    %s44 = sld [smem:[#allocation3 + $0x2]]
    %v45 = vstv %s44
    %v46 = vmul.f32 %v45, %v29
    %48 = vrot.lane.b32.xlu0 %v46, 126
    %v49 = vpop.permute.xlu0 %48
    %v51 = vadd.f32 %v43, %v49
    %vm52 = vcmask 57344
    %53 = vst.msk [vmem:[#allocation6] sm:$0x1] %vm52, %v51
    // Predicated region
    $region18: #{conv1d_pallas.1} parent=1 // pred_check
      _
    $region19: #{conv1d_pallas.1} parent=1 // pred_check_branch
      %55 = sbr.rel (0) target = $region21
    $region20: #{conv1d_pallas.1} parent=1 // pred_region
      %57 = vsyncadd [#allocation4], 0
      %s59 = sshll.u32 [#allocation6], 4
      %s60 = int_to_ptr.vmem [resolvable:$true] %s59
      %s61 = sshll.u32 %s3, 4
      %s62 = int_to_ptr.hbm [resolvable:$true] %s61
      %64 = dma.vmem_to_hbm [thread:$0]  %s60, 16, %s62, [#allocation4]
    $region21: #{conv1d_pallas.1} parent=1 // pred_fallthru
      _
    // Predicated region
    $region22: #{conv1d_pallas.1} parent=1 // pred_check
      _
    $region23: #{conv1d_pallas.1} parent=1 // pred_check_branch
      %66 = sbr.rel (0) target = $region25
    $region24: #{conv1d_pallas.1} parent=1 // pred_region
      %68 = dma.done [#allocation4], 16
    $region25: #{conv1d_pallas.1} parent=1 // pred_fallthru
      _
    %69 = vsyncpa [#allocation4], 1
    %70 = vsyncpa [#allocation5], 1

</llo_original>
